<compile_context>
chip_gen: v6e
topology: v6e:2x2x1
jax: 0.10.0
libtpu: 0.0.40
codegen_flags: <defaults>
</compile_context>

<pallas_src>
import jax
import jax.numpy as jnp
from jax.experimental import pallas as pl
from jax.experimental.pallas import tpu as pltpu


# ----------------------------------------------------------------------------
# Pallas kernels: single-invocation fused encode (whole problem VMEM-resident)
#   out = gelu(x @ W + t * w_t [+ prop @ W_p] + b)
#   x    : (B, D) f32   -> cast to bf16 in-kernel for the MXU feed
#   t    : (B, 1) f32
#   prop : (B, P) f32   (optional, statically specialized)
#   W    : (D, H) bf16,  W_p : (P, H) bf16
#   w_t  : (1, H) f32,   b   : (1, H) f32
# ----------------------------------------------------------------------------
def _encoder_kernel_prop(x_ref, t_ref, p_ref, w_ref, wt_ref, wp_ref, b_ref, o_ref):
    z = jnp.dot(x_ref[...].astype(jnp.bfloat16), w_ref[...],
                preferred_element_type=jnp.float32)
    z = z + jnp.dot(p_ref[...].astype(jnp.bfloat16), wp_ref[...],
                    preferred_element_type=jnp.float32)
    z = z + t_ref[...] * wt_ref[...]          # (B,1)*(1,H) -> (B,H), f32 VPU
    z = z + b_ref[...]
    o_ref[...] = jax.nn.gelu(z).astype(o_ref.dtype)


def _encoder_kernel_noprop(x_ref, t_ref, w_ref, wt_ref, b_ref, o_ref):
    z = jnp.dot(x_ref[...].astype(jnp.bfloat16), w_ref[...],
                preferred_element_type=jnp.float32)
    z = z + t_ref[...] * wt_ref[...]
    z = z + b_ref[...]
    o_ref[...] = jax.nn.gelu(z).astype(o_ref.dtype)


def _forward_pallas(x_flat, t2d, prop, w, w_t, w_p, b):
    """Gridless, fully VMEM-resident fused encoder GEMM."""
    B, D = x_flat.shape
    H = w.shape[1]

    if prop is not None:
        P = prop.shape[1]
        kernel = _encoder_kernel_prop
        args = (x_flat, t2d, prop, w, w_t, w_p, b)
        flops = 2 * B * D * H + 2 * B * P * H + 4 * B * H
        bytes_accessed = (x_flat.size * 4 + t2d.size * 4 + prop.size * 4
                          + w.size * 2 + w_p.size * 2 + w_t.size * 4
                          + b.size * 4 + B * H * 4)
    else:
        kernel = _encoder_kernel_noprop
        args = (x_flat, t2d, w, w_t, b)
        flops = 2 * B * D * H + 4 * B * H
        bytes_accessed = (x_flat.size * 4 + t2d.size * 4
                          + w.size * 2 + w_t.size * 4
                          + b.size * 4 + B * H * 4)

    vmem_spec = lambda: pl.BlockSpec(memory_space=pltpu.MemorySpace.VMEM)
    return pl.pallas_call(
        kernel,
        out_shape=jax.ShapeDtypeStruct((B, H), jnp.float32),
        in_specs=[vmem_spec() for _ in args],
        out_specs=vmem_spec(),
        cost_estimate=pl.CostEstimate(
            flops=flops,
            transcendentals=B * H,          # gelu tanh
            bytes_accessed=bytes_accessed),
    )(*args)


@jax.jit
def _fused_encode(x_flat, t, prop, w, w_t, w_p, b):
    """Thin wrapper: only a reshape of t; everything else happens in-kernel.
    `prop` may be None (statically specialized at trace time)."""
    B = x_flat.shape[0]
    t2d = t.reshape(B, 1).astype(jnp.float32)
    return _forward_pallas(x_flat.astype(jnp.float32), t2d, prop, w, w_t, w_p, b)


# ----------------------------------------------------------------------------
# Concrete Encoder (mirrors the abstract base-class forward contract)
# ----------------------------------------------------------------------------
class PallasEncoder:
    def __init__(self, in_channels=4, spatial=16, hidden=128, prop_dim=8,
                 key=None):
        if key is None:
            key = jax.random.PRNGKey(0)
        D = in_channels * spatial * spatial
        k1, k2, k3, k4 = jax.random.split(key, 4)
        # Master weights in f32; the GEMM streams pre-cast bf16 copies.
        self.w = (jax.random.normal(k1, (D, hidden), jnp.float32)
                  / jnp.sqrt(jnp.float32(D)))
        self.b = jax.random.normal(k2, (1, hidden), jnp.float32) * 0.01
        self.w_t = jax.random.normal(k3, (1, hidden), jnp.float32) * 0.1
        self.w_p = (jax.random.normal(k4, (prop_dim, hidden), jnp.float32)
                    / jnp.sqrt(jnp.float32(prop_dim)))
        self.prop_dim = prop_dim
        self.hidden = hidden
        self._masked_species = False

        # One-time bf16 casts (done at init, not per forward call).
        self.w_bf16 = self.w.astype(jnp.bfloat16)
        self.w_p_bf16 = self.w_p.astype(jnp.bfloat16)

    # --- Encoder contract hooks -------------------------------------------
    def _convert_inputs(self, x, **kwargs):
        # OMG standard (NCHW) -> flattened (B, D) features the encoder expects.
        B = x.shape[0]
        return (x.reshape(B, -1),)

    def _forward(self, x_flat, t, prop=None, **kwargs):
        return _fused_encode(x_flat, t, prop,
                             self.w_bf16, self.w_t, self.w_p_bf16, self.b)

    def _convert_outputs(self, x, **kwargs):
        return x  # already (B, hidden) OMG latent format

    def forward(self, x, t, prop=None, **kwargs):
        x = self._convert_inputs(x, **kwargs)
        x = self._forward(*x, t, prop, **kwargs)
        x = self._convert_outputs(x, **kwargs)
        return x

    def enable_masked_species(self) -> None:
        # TODO(synk): abstract in reference; no concrete semantics to reproduce.
        self._masked_species = True


# ----------------------------------------------------------------------------
if __name__ == "__main__":
    key = jax.random.PRNGKey(0)
    kx, kt, kp = jax.random.split(key, 3)

    B, C, Hs, Ws = 2, 4, 16, 16
    x = jax.random.normal(kx, (B, C, Hs, Ws), jnp.float32)      # NCHW input
    t = jax.random.uniform(kt, (B,), jnp.float32)               # timesteps
    prop = jax.random.normal(kp, (B, 8), jnp.float32)           # property conditioning

    enc = PallasEncoder(in_channels=C, spatial=Hs, hidden=128, prop_dim=8)
    out = jax.block_until_ready(enc.forward(x, t, prop))
    out_noprop = jax.block_until_ready(enc.forward(x, t))       # prop=None specialization

    # Pure-JAX reference with the same bf16 rounding on the MXU operands.
    x_flat = x.reshape(B, -1)

    def ref_encode(prop_arr):
        xw = (x_flat.astype(jnp.bfloat16).astype(jnp.float32)
              @ enc.w.astype(jnp.bfloat16).astype(jnp.float32))
        z = xw + t[:, None] * enc.w_t
        if prop_arr is not None:
            z = z + (prop_arr.astype(jnp.bfloat16).astype(jnp.float32)
                     @ enc.w_p.astype(jnp.bfloat16).astype(jnp.float32))
        z = z + enc.b
        return jax.nn.gelu(z)

    assert out.shape == (B, 128)
    assert out_noprop.shape == (B, 128)
    assert jnp.allclose(out, ref_encode(prop), atol=2e-3, rtol=2e-3)
    assert jnp.allclose(out_noprop, ref_encode(None), atol=2e-3, rtol=2e-3)

    print("KERNEL_OK")
</pallas_src>

<mosaic_0001>
module attributes {stable_mosaic.version = 11 : i64} {
  func.func @_encoder_kernel_prop(%arg0: memref<2x1024xf32, #tpu.memory_space<vmem>>, %arg1: memref<2x1xf32, #tpu.memory_space<vmem>>, %arg2: memref<2x8xf32, #tpu.memory_space<vmem>>, %arg3: memref<1024x128xbf16, #tpu.memory_space<vmem>>, %arg4: memref<1x128xf32, #tpu.memory_space<vmem>>, %arg5: memref<8x128xbf16, #tpu.memory_space<vmem>>, %arg6: memref<1x128xf32, #tpu.memory_space<vmem>>, %arg7: memref<2x128xf32, #tpu.memory_space<vmem>>) attributes {dimension_semantics = [], scalar_prefetch = 0 : i64, scratch_operands = 0 : i64, tpu.core_type = #tpu.core_type<tc>} {
    %c0 = arith.constant 0 : index
    %c0_0 = arith.constant 0 : index
    %0 = vector.load %arg0[%c0, %c0_0] : memref<2x1024xf32, #tpu.memory_space<vmem>>, vector<2x1024xf32>
    %1 = arith.truncf %0 : vector<2x1024xf32> to vector<2x1024xbf16>
    %c0_1 = arith.constant 0 : index
    %c0_2 = arith.constant 0 : index
    %2 = vector.load %arg3[%c0_1, %c0_2] : memref<1024x128xbf16, #tpu.memory_space<vmem>>, vector<1024x128xbf16>
    %cst = arith.constant dense<0.000000e+00> : vector<2x128xf32>
    %3 = tpu.matmul %1, %2, %cst {dimension_numbers = #tpu.dot_dimension_numbers<[1], [0], [0], [1], [0, 0, 1, 1], [], []>} : vector<2x1024xbf16>, vector<1024x128xbf16>, vector<2x128xf32> -> vector<2x128xf32>
    %c0_3 = arith.constant 0 : index
    %c0_4 = arith.constant 0 : index
    %4 = vector.load %arg2[%c0_3, %c0_4] : memref<2x8xf32, #tpu.memory_space<vmem>>, vector<2x8xf32>
    %5 = arith.truncf %4 : vector<2x8xf32> to vector<2x8xbf16>
    %c0_5 = arith.constant 0 : index
    %c0_6 = arith.constant 0 : index
    %6 = vector.load %arg5[%c0_5, %c0_6] : memref<8x128xbf16, #tpu.memory_space<vmem>>, vector<8x128xbf16>
    %cst_7 = arith.constant dense<0.000000e+00> : vector<2x128xf32>
    %7 = tpu.matmul %5, %6, %cst_7 {dimension_numbers = #tpu.dot_dimension_numbers<[1], [0], [0], [1], [0, 0, 1, 1], [], []>} : vector<2x8xbf16>, vector<8x128xbf16>, vector<2x128xf32> -> vector<2x128xf32>
    %8 = arith.addf %3, %7 : vector<2x128xf32>
    %c0_8 = arith.constant 0 : index
    %c0_9 = arith.constant 0 : index
    %9 = vector.load %arg1[%c0_8, %c0_9] : memref<2x1xf32, #tpu.memory_space<vmem>>, vector<2x1xf32>
    %c0_10 = arith.constant 0 : index
    %c0_11 = arith.constant 0 : index
    %10 = vector.load %arg4[%c0_10, %c0_11] : memref<1x128xf32, #tpu.memory_space<vmem>>, vector<1x128xf32>
    %11 = vector.broadcast %9 : vector<2x1xf32> to vector<2x128xf32>
    %12 = vector.broadcast %10 : vector<1x128xf32> to vector<2x128xf32>
    %13 = arith.mulf %11, %12 : vector<2x128xf32>
    %14 = arith.addf %8, %13 : vector<2x128xf32>
    %c0_12 = arith.constant 0 : index
    %c0_13 = arith.constant 0 : index
    %15 = vector.load %arg6[%c0_12, %c0_13] : memref<1x128xf32, #tpu.memory_space<vmem>>, vector<1x128xf32>
    %16 = vector.broadcast %15 : vector<1x128xf32> to vector<2x128xf32>
    %17 = arith.addf %14, %16 : vector<2x128xf32>
    %18 = arith.mulf %17, %17 : vector<2x128xf32>
    %19 = arith.mulf %17, %18 : vector<2x128xf32>
    %cst_14 = arith.constant 4.471500e-02 : f32
    %20 = vector.broadcast %cst_14 : f32 to vector<2x128xf32>
    %21 = arith.mulf %20, %19 : vector<2x128xf32>
    %22 = arith.addf %17, %21 : vector<2x128xf32>
    %cst_15 = arith.constant 0.797884583 : f32
    %23 = vector.broadcast %cst_15 : f32 to vector<2x128xf32>
    %24 = arith.mulf %23, %22 : vector<2x128xf32>
    %25 = math.tanh %24 : vector<2x128xf32>
    %cst_16 = arith.constant 1.000000e+00 : f32
    %26 = vector.broadcast %cst_16 : f32 to vector<2x128xf32>
    %27 = arith.addf %26, %25 : vector<2x128xf32>
    %cst_17 = arith.constant 5.000000e-01 : f32
    %28 = vector.broadcast %cst_17 : f32 to vector<2x128xf32>
    %29 = arith.mulf %28, %27 : vector<2x128xf32>
    %30 = arith.mulf %17, %29 : vector<2x128xf32>
    %c0_18 = arith.constant 0 : index
    %c0_19 = arith.constant 0 : index
    %31 = vector.load %arg7[%c0_18, %c0_19] : memref<2x128xf32, #tpu.memory_space<vmem>>, vector<2x128xf32>
    tpu.vector_store %arg7[%c0_18, %c0_19], %30 {strides = array<i32>} : memref<2x128xf32, #tpu.memory_space<vmem>>, vector<2x128xf32>,
    return
  }
}

</mosaic_0001>

<llo_original>
// kernel: _fused_encode.1
$region0: #{_fused_encode.1}
  #allocation0 [shape = 'u32[]', space=smem, size = 0x4, offset = 0x4, fixed_abs, tag = 'smem constant byte address 0x4 - core index']
  #allocation1 [shape = 'u32[144,128]{1,0:T(1,128)}', space=vmem, size = 0x12000, scoped, tag = 'internal scratch']
  %s0 = inlined_call_operand.hbm [shape: f32[2,1024], index: 0, kind: input, shape index: {}]
  %s1 = inlined_call_operand.vmem [shape: f32[2,1], index: 1, kind: input, shape index: {}]
  %s2 = inlined_call_operand.vmem [shape: f32[2,8], index: 2, kind: input, shape index: {}]
  %s3 = inlined_call_operand.hbm [shape: bf16[1024,128], index: 3, kind: input, shape index: {}]
  %s4 = inlined_call_operand.vmem [shape: f32[1,128], index: 4, kind: input, shape index: {}]
  %s5 = inlined_call_operand.vmem [shape: bf16[8,128], index: 5, kind: input, shape index: {}]
  %s6 = inlined_call_operand.vmem [shape: f32[1,128], index: 6, kind: input, shape index: {}]
  %s7 = inlined_call_operand.hbm [shape: f32[2,128], index: 7, kind: output, shape index: {}]
  %s8 = sld [smem:[#allocation0]]
  $region46: #{_fused_encode.1} parent=0
    _
  %s10 = ssub.s32 1, %s8
  %s11 = scalar_select 0, %s10, %s8
  $region1: #{_fused_encode.1} parent=0
    #allocation2 [shape = 'u8[8192]{0}', space=vmem, size = 0x2000, scoped, tag = 'input window, operand 0, single buffered']
    #allocation3 [shape = 's32[1]{0}', space=sflag, size = 0x4, scoped, tag = 'scoped memory for _fused_encode.1']
    #allocation4 [shape = 's32[1]{0}', space=sflag, size = 0x4, scoped, tag = 'scoped memory for _fused_encode.1']
    #allocation5 [shape = 'u8[262144]{0}', space=vmem, size = 0x40000, scoped, tag = 'input window, operand 3, single buffered']
    #allocation6 [shape = 's32[1]{0}', space=sflag, size = 0x4, scoped, tag = 'scoped memory for _fused_encode.1']
    #allocation7 [shape = 'u8[1024]{0}', space=vmem, size = 0x400, scoped, tag = 'output window, operand 0, single buffered']
    %12 = vsyncpa [#allocation3], 0
    %13 = vsyncpa [#allocation6], 0
    %14 = vsyncpa [#allocation4], 0
    // Predicated region
    $region2: #{_fused_encode.1} parent=1 // pred_check
      _
    $region3: #{_fused_encode.1} parent=1 // pred_check_branch
      %16 = sbr.rel (0) target = $region5
    $region4: #{_fused_encode.1} parent=1 // pred_region
      %s18 = ssub.s32 256, 256
      %19 = vsyncadd [#allocation3], %s18
      %s21 = sshll.u32 [#allocation2], 4
      %s22 = int_to_ptr.vmem [resolvable:$true] %s21
      %24 = dma.hbm_to_vmem [thread:$0]  %s0, 256, %s22, [#allocation3]
    $region5: #{_fused_encode.1} parent=1 // pred_fallthru
      _
    // Predicated region
    $region6: #{_fused_encode.1} parent=1 // pred_check
      _
    $region7: #{_fused_encode.1} parent=1 // pred_check_branch
      %26 = sbr.rel (0) target = $region9
    $region8: #{_fused_encode.1} parent=1 // pred_region
      _
    $region9: #{_fused_encode.1} parent=1 // pred_fallthru
      _
    // Predicated region
    $region10: #{_fused_encode.1} parent=1 // pred_check
      _
    $region11: #{_fused_encode.1} parent=1 // pred_check_branch
      %28 = sbr.rel (0) target = $region13
    $region12: #{_fused_encode.1} parent=1 // pred_region
      _
    $region13: #{_fused_encode.1} parent=1 // pred_fallthru
      _
    // Predicated region
    $region14: #{_fused_encode.1} parent=1 // pred_check
      _
    $region15: #{_fused_encode.1} parent=1 // pred_check_branch
      %30 = sbr.rel (0) target = $region17
    $region16: #{_fused_encode.1} parent=1 // pred_region
      %s32 = ssub.s32 8192, 8192
      %33 = vsyncadd [#allocation6], %s32
      %s34 = sshll.u32 [#allocation5], 4
      %s35 = int_to_ptr.vmem [resolvable:$true] %s34
      %40 = dma.hbm_to_vmem [thread:$0]  %s3, 8192, %s35, [#allocation6], 64, 64, 4
    $region17: #{_fused_encode.1} parent=1 // pred_fallthru
      _
    // Predicated region
    $region18: #{_fused_encode.1} parent=1 // pred_check
      _
    $region19: #{_fused_encode.1} parent=1 // pred_check_branch
      %42 = sbr.rel (0) target = $region21
    $region20: #{_fused_encode.1} parent=1 // pred_region
      _
    $region21: #{_fused_encode.1} parent=1 // pred_fallthru
      _
    // Predicated region
    $region22: #{_fused_encode.1} parent=1 // pred_check
      _
    $region23: #{_fused_encode.1} parent=1 // pred_check_branch
      %44 = sbr.rel (0) target = $region25
    $region24: #{_fused_encode.1} parent=1 // pred_region
      _
    $region25: #{_fused_encode.1} parent=1 // pred_fallthru
      _
    // Predicated region
    $region26: #{_fused_encode.1} parent=1 // pred_check
      _
    $region27: #{_fused_encode.1} parent=1 // pred_check_branch
      %46 = sbr.rel (0) target = $region29
    $region28: #{_fused_encode.1} parent=1 // pred_region
      _
    $region29: #{_fused_encode.1} parent=1 // pred_fallthru
      _
    // Predicated region
    $region30: #{_fused_encode.1} parent=1 // pred_check
      _
    $region31: #{_fused_encode.1} parent=1 // pred_check_branch
      %48 = sbr.rel (0) target = $region33
    $region32: #{_fused_encode.1} parent=1 // pred_region
      %49 = dma.done [#allocation3], 256
    $region33: #{_fused_encode.1} parent=1 // pred_fallthru
      _
    // Predicated region
    $region34: #{_fused_encode.1} parent=1 // pred_check
      _
    $region35: #{_fused_encode.1} parent=1 // pred_check_branch
      %51 = sbr.rel (0) target = $region37
    $region36: #{_fused_encode.1} parent=1 // pred_region
      %52 = dma.done [#allocation6], 8192
    $region37: #{_fused_encode.1} parent=1 // pred_fallthru
      _
    %v54 = vld [vmem:[#allocation2] sm:$0xff]
    %v55 = vld [vmem:[#allocation2 + $0x8] sm:$0xff]
    %v58 = vcombine.high %v54, %v54
    %v60 = vunpack.c.l.s4 1983009808
    %v61 = vunpack.c.0.s8 %v60
    %v62 = vlaneseq
    %v63 = vshrl.u32 %v62, 7
    %v64 = vsub.s32 %v61, %v63
    %v65 = vrot.slane %v54, %v64
    %v67 = vunpack.c.l.s4 1983009808
    %v68 = vunpack.c.0.s8 %v67
    %v69 = vlaneseq
    %v70 = vshrl.u32 %v69, 7
    %v71 = vsub.s32 %v68, %v70
    %v72 = vrot.slane %v58, %v71
    %v73 = vcombine.high %v65, %v65
    %v74 = vcombine.high %v72, %v72
    %v75 = vcombine.high %v55, %v55
    %v77 = vunpack.c.l.s4 1983009808
    %v78 = vunpack.c.0.s8 %v77
    %v79 = vlaneseq
    %v80 = vshrl.u32 %v79, 7
    %v81 = vsub.s32 %v78, %v80
    %v82 = vrot.slane %v55, %v81
    %v84 = vunpack.c.l.s4 1983009808
    %v85 = vunpack.c.0.s8 %v84
    %v86 = vlaneseq
    %v87 = vshrl.u32 %v86, 7
    %v88 = vsub.s32 %v85, %v87
    %v89 = vrot.slane %v75, %v88
    %v90 = vcombine.high %v82, %v82
    %v91 = vcombine.high %v89, %v89
    %v100 = vpack.c.bf16 %v65, %v65
    %v101 = vpack.c.bf16 %v73, %v73
    %v102 = vpack.c.bf16 %v72, %v72
    %v103 = vpack.c.bf16 %v74, %v74
    %v104 = vpack.c.bf16 %v82, %v82
    %v105 = vpack.c.bf16 %v90, %v90
    %v106 = vpack.c.bf16 %v89, %v89
    %v107 = vpack.c.bf16 %v91, %v91
    %v108 = vld [vmem:[#allocation5] sm:$0xf]
    %v109 = vld [vmem:[#allocation5 + $0x4] sm:$0xf]
    %v110 = vld [vmem:[#allocation5 + $0x8] sm:$0xf]
    %v111 = vld [vmem:[#allocation5 + $0xc] sm:$0xf]
    %v112 = vld [vmem:[#allocation5 + $0x10] sm:$0xf]
    %v113 = vld [vmem:[#allocation5 + $0x14] sm:$0xf]
    %v114 = vld [vmem:[#allocation5 + $0x18] sm:$0xf]
    %v115 = vld [vmem:[#allocation5 + $0x1c] sm:$0xf]
    %v116 = vld [vmem:[#allocation5 + $0x20] sm:$0xf]
    %v117 = vld [vmem:[#allocation5 + $0x24] sm:$0xf]
    %v118 = vld [vmem:[#allocation5 + $0x28] sm:$0xf]
    %v119 = vld [vmem:[#allocation5 + $0x2c] sm:$0xf]
    %v120 = vld [vmem:[#allocation5 + $0x30] sm:$0xf]
    %v121 = vld [vmem:[#allocation5 + $0x34] sm:$0xf]
    %v122 = vld [vmem:[#allocation5 + $0x38] sm:$0xf]
    %v123 = vld [vmem:[#allocation5 + $0x3c] sm:$0xf]
    %v124 = vld [vmem:[#allocation5 + $0x40] sm:$0xf]
    %v125 = vld [vmem:[#allocation5 + $0x44] sm:$0xf]
    %v126 = vld [vmem:[#allocation5 + $0x48] sm:$0xf]
    %v127 = vld [vmem:[#allocation5 + $0x4c] sm:$0xf]
    %v128 = vld [vmem:[#allocation5 + $0x50] sm:$0xf]
    %v129 = vld [vmem:[#allocation5 + $0x54] sm:$0xf]
    %v130 = vld [vmem:[#allocation5 + $0x58] sm:$0xf]
    %v131 = vld [vmem:[#allocation5 + $0x5c] sm:$0xf]
    %v132 = vld [vmem:[#allocation5 + $0x60] sm:$0xf]
    %v133 = vld [vmem:[#allocation5 + $0x64] sm:$0xf]
    %v134 = vld [vmem:[#allocation5 + $0x68] sm:$0xf]
    %v135 = vld [vmem:[#allocation5 + $0x6c] sm:$0xf]
    %v136 = vld [vmem:[#allocation5 + $0x70] sm:$0xf]
    %v137 = vld [vmem:[#allocation5 + $0x74] sm:$0xf]
    %v138 = vld [vmem:[#allocation5 + $0x78] sm:$0xf]
    %v139 = vld [vmem:[#allocation5 + $0x7c] sm:$0xf]
    %v140 = vld [vmem:[#allocation5 + $0x80] sm:$0xf]
    %v141 = vld [vmem:[#allocation5 + $0x84] sm:$0xf]
    %v142 = vld [vmem:[#allocation5 + $0x88] sm:$0xf]
    %v143 = vld [vmem:[#allocation5 + $0x8c] sm:$0xf]
    %v144 = vld [vmem:[#allocation5 + $0x90] sm:$0xf]
    %v145 = vld [vmem:[#allocation5 + $0x94] sm:$0xf]
    %v146 = vld [vmem:[#allocation5 + $0x98] sm:$0xf]
    %v147 = vld [vmem:[#allocation5 + $0x9c] sm:$0xf]
    %v148 = vld [vmem:[#allocation5 + $0xa0] sm:$0xf]
    %v149 = vld [vmem:[#allocation5 + $0xa4] sm:$0xf]
    %v150 = vld [vmem:[#allocation5 + $0xa8] sm:$0xf]
    %v151 = vld [vmem:[#allocation5 + $0xac] sm:$0xf]
    %v152 = vld [vmem:[#allocation5 + $0xb0] sm:$0xf]
    %v153 = vld [vmem:[#allocation5 + $0xb4] sm:$0xf]
    %v154 = vld [vmem:[#allocation5 + $0xb8] sm:$0xf]
    %v155 = vld [vmem:[#allocation5 + $0xbc] sm:$0xf]
    %v156 = vld [vmem:[#allocation5 + $0xc0] sm:$0xf]
    %v157 = vld [vmem:[#allocation5 + $0xc4] sm:$0xf]
    %v158 = vld [vmem:[#allocation5 + $0xc8] sm:$0xf]
    %v159 = vld [vmem:[#allocation5 + $0xcc] sm:$0xf]
    %v160 = vld [vmem:[#allocation5 + $0xd0] sm:$0xf]
    %v161 = vld [vmem:[#allocation5 + $0xd4] sm:$0xf]
    %v162 = vld [vmem:[#allocation5 + $0xd8] sm:$0xf]
    %v163 = vld [vmem:[#allocation5 + $0xdc] sm:$0xf]
    %v164 = vld [vmem:[#allocation5 + $0xe0] sm:$0xf]
    %v165 = vld [vmem:[#allocation5 + $0xe4] sm:$0xf]
    %v166 = vld [vmem:[#allocation5 + $0xe8] sm:$0xf]
    %v167 = vld [vmem:[#allocation5 + $0xec] sm:$0xf]
    %v168 = vld [vmem:[#allocation5 + $0xf0] sm:$0xf]
    %v169 = vld [vmem:[#allocation5 + $0xf4] sm:$0xf]
    %v170 = vld [vmem:[#allocation5 + $0xf8] sm:$0xf]
    %v171 = vld [vmem:[#allocation5 + $0xfc] sm:$0xf]
    %v172 = vld [vmem:[#allocation5 + $0x100] sm:$0xf]
    %v173 = vld [vmem:[#allocation5 + $0x104] sm:$0xf]
    %v174 = vld [vmem:[#allocation5 + $0x108] sm:$0xf]
    %v175 = vld [vmem:[#allocation5 + $0x10c] sm:$0xf]
    %v176 = vld [vmem:[#allocation5 + $0x110] sm:$0xf]
    %v177 = vld [vmem:[#allocation5 + $0x114] sm:$0xf]
    %v178 = vld [vmem:[#allocation5 + $0x118] sm:$0xf]
    %v179 = vld [vmem:[#allocation5 + $0x11c] sm:$0xf]
    %v180 = vld [vmem:[#allocation5 + $0x120] sm:$0xf]
    %v181 = vld [vmem:[#allocation5 + $0x124] sm:$0xf]
    %v182 = vld [vmem:[#allocation5 + $0x128] sm:$0xf]
    %v183 = vld [vmem:[#allocation5 + $0x12c] sm:$0xf]
    %v184 = vld [vmem:[#allocation5 + $0x130] sm:$0xf]
    %v185 = vld [vmem:[#allocation5 + $0x134] sm:$0xf]
    %v186 = vld [vmem:[#allocation5 + $0x138] sm:$0xf]
    %v187 = vld [vmem:[#allocation5 + $0x13c] sm:$0xf]
    %v188 = vld [vmem:[#allocation5 + $0x140] sm:$0xf]
    %v189 = vld [vmem:[#allocation5 + $0x144] sm:$0xf]
    %v190 = vld [vmem:[#allocation5 + $0x148] sm:$0xf]
    %v191 = vld [vmem:[#allocation5 + $0x14c] sm:$0xf]
    %v192 = vld [vmem:[#allocation5 + $0x150] sm:$0xf]
    %v193 = vld [vmem:[#allocation5 + $0x154] sm:$0xf]
    %v194 = vld [vmem:[#allocation5 + $0x158] sm:$0xf]
    %v195 = vld [vmem:[#allocation5 + $0x15c] sm:$0xf]
    %v196 = vld [vmem:[#allocation5 + $0x160] sm:$0xf]
    %v197 = vld [vmem:[#allocation5 + $0x164] sm:$0xf]
    %v198 = vld [vmem:[#allocation5 + $0x168] sm:$0xf]
    %v199 = vld [vmem:[#allocation5 + $0x16c] sm:$0xf]
    %v200 = vld [vmem:[#allocation5 + $0x170] sm:$0xf]
    %v201 = vld [vmem:[#allocation5 + $0x174] sm:$0xf]
    %v202 = vld [vmem:[#allocation5 + $0x178] sm:$0xf]
    %v203 = vld [vmem:[#allocation5 + $0x17c] sm:$0xf]
    %v204 = vld [vmem:[#allocation5 + $0x180] sm:$0xf]
    %v205 = vld [vmem:[#allocation5 + $0x184] sm:$0xf]
    %v206 = vld [vmem:[#allocation5 + $0x188] sm:$0xf]
    %v207 = vld [vmem:[#allocation5 + $0x18c] sm:$0xf]
    %v208 = vld [vmem:[#allocation5 + $0x190] sm:$0xf]
    %v209 = vld [vmem:[#allocation5 + $0x194] sm:$0xf]
    %v210 = vld [vmem:[#allocation5 + $0x198] sm:$0xf]
    %v211 = vld [vmem:[#allocation5 + $0x19c] sm:$0xf]
    %v212 = vld [vmem:[#allocation5 + $0x1a0] sm:$0xf]
    %v213 = vld [vmem:[#allocation5 + $0x1a4] sm:$0xf]
    %v214 = vld [vmem:[#allocation5 + $0x1a8] sm:$0xf]
    %v215 = vld [vmem:[#allocation5 + $0x1ac] sm:$0xf]
    %v216 = vld [vmem:[#allocation5 + $0x1b0] sm:$0xf]
    %v217 = vld [vmem:[#allocation5 + $0x1b4] sm:$0xf]
    %v218 = vld [vmem:[#allocation5 + $0x1b8] sm:$0xf]
    %v219 = vld [vmem:[#allocation5 + $0x1bc] sm:$0xf]
    %v220 = vld [vmem:[#allocation5 + $0x1c0] sm:$0xf]
    %v221 = vld [vmem:[#allocation5 + $0x1c4] sm:$0xf]
    %v222 = vld [vmem:[#allocation5 + $0x1c8] sm:$0xf]
    %v223 = vld [vmem:[#allocation5 + $0x1cc] sm:$0xf]
    %v224 = vld [vmem:[#allocation5 + $0x1d0] sm:$0xf]
    %v225 = vld [vmem:[#allocation5 + $0x1d4] sm:$0xf]
    %v226 = vld [vmem:[#allocation5 + $0x1d8] sm:$0xf]
    %v227 = vld [vmem:[#allocation5 + $0x1dc] sm:$0xf]
    %v228 = vld [vmem:[#allocation5 + $0x1e0] sm:$0xf]
    %v229 = vld [vmem:[#allocation5 + $0x1e4] sm:$0xf]
    %v230 = vld [vmem:[#allocation5 + $0x1e8] sm:$0xf]
    %v231 = vld [vmem:[#allocation5 + $0x1ec] sm:$0xf]
    %v232 = vld [vmem:[#allocation5 + $0x1f0] sm:$0xf]
    %v233 = vld [vmem:[#allocation5 + $0x1f4] sm:$0xf]
    %v234 = vld [vmem:[#allocation5 + $0x1f8] sm:$0xf]
    %v235 = vld [vmem:[#allocation5 + $0x1fc] sm:$0xf]
    %v236 = vld [vmem:[%s2] sm:$0x3]
    %v237 = vpack.c.bf16 %v236, %v236
    %v238 = vld [vmem:[%s5] sm:$0xf]
    %vm239 = vcmask 64512
    %v241 = vsel %vm239, %v237, 0
    %vm243 = vcmask 1043456
    %v245 = vsel %vm243, %v238, 0
    %247 = vmatprep.subr.bf16.mxu0 0
    %248 = vmatpush1.bf16.msra.mxu0 0
    %249 = vmatprep.subr.bf16.mxu0 0
    %250 = vmatpush1.bf16.msra.mxu0 0
    %251 = vmatprep.subr.bf16.mxu0 0
    %252 = vmatpush1.bf16.msra.mxu0 0
    %253 = vmatprep.subr.bf16.mxu0 0
    %254 = vmatpush1.bf16.msra.mxu0 0
    %255 = vmatprep.subr.bf16.mxu0 0
    %256 = vmatpush1.bf16.msra.mxu0 0
    %257 = vmatprep.subr.bf16.mxu0 0
    %258 = vmatpush1.bf16.msra.mxu0 0
    %259 = vmatprep.subr.bf16.mxu0 0
    %260 = vmatpush1.bf16.msra.mxu0 0
    %261 = vmatprep.subr.bf16.mxu0 0
    %262 = vmatpush1.bf16.msra.mxu0 %v245
    %263 = vmatprep.subr.bf16.mxu0 0
    %264 = vmatpush2.bf16.msra.mxu0 0
    %265 = vmatprep.subr.bf16.mxu0 0
    %266 = vmatpush2.bf16.msra.mxu0 0
    %267 = vmatprep.subr.bf16.mxu0 0
    %268 = vmatpush2.bf16.msra.mxu0 0
    %269 = vmatprep.subr.bf16.mxu0 0
    %270 = vmatpush2.bf16.msra.mxu0 0
    %271 = vmatprep.subr.bf16.mxu0 0
    %272 = vmatpush2.bf16.msra.mxu0 0
    %273 = vmatprep.subr.bf16.mxu0 0
    %274 = vmatpush2.bf16.msra.mxu0 0
    %275 = vmatprep.subr.bf16.mxu0 0
    %276 = vmatpush2.bf16.msra.mxu0 0
    %277 = vmatprep.subr.bf16.mxu0 0
    %278 = vmatpush2.bf16.msra.mxu0 0
    %279 = vmatprep.mubr.bf16.mxu0 0
    %280 = vmatmul.mubr.bf16.gmra.mxu0 %v241
    %v281 = vpop.f32.mrf.mxu0
    %v282 = vadd.f32 0.0, %v281
    %v283 = vpop.f32.mrf.mxu0
    %v284 = vpop.f32.mrf.mxu0
    %v285 = vpop.f32.mrf.mxu0
    %286 = vdwg.mxu0
    %v415 = vunpack.c.l.b16 %v108
    %v416 = vunpack.c.l.b16 %v109
    %v417 = vunpack.c.l.b16 %v110
    %v418 = vunpack.c.l.b16 %v111
    %v419 = vunpack.c.l.b16 %v112
    %v420 = vunpack.c.l.b16 %v113
    %v421 = vunpack.c.l.b16 %v114
    %v422 = vunpack.c.l.b16 %v115
    %v423 = vunpack.c.l.b16 %v116
    %v424 = vunpack.c.l.b16 %v117
    %v425 = vunpack.c.l.b16 %v118
    %v426 = vunpack.c.l.b16 %v119
    %v427 = vunpack.c.l.b16 %v120
    %v428 = vunpack.c.l.b16 %v121
    %v429 = vunpack.c.l.b16 %v122
    %v430 = vunpack.c.l.b16 %v123
    %v431 = vunpack.c.l.b16 %v124
    %v432 = vunpack.c.l.b16 %v125
    %v433 = vunpack.c.l.b16 %v126
    %v434 = vunpack.c.l.b16 %v127
    %v435 = vunpack.c.l.b16 %v128
    %v436 = vunpack.c.l.b16 %v129
    %v437 = vunpack.c.l.b16 %v130
    %v438 = vunpack.c.l.b16 %v131
    %v439 = vunpack.c.l.b16 %v132
    %v440 = vunpack.c.l.b16 %v133
    %v441 = vunpack.c.l.b16 %v134
    %v442 = vunpack.c.l.b16 %v135
    %v443 = vunpack.c.l.b16 %v136
    %v444 = vunpack.c.l.b16 %v137
    %v445 = vunpack.c.l.b16 %v138
    %v446 = vunpack.c.l.b16 %v139
    %v447 = vunpack.c.l.b16 %v140
    %v448 = vunpack.c.l.b16 %v141
    %v449 = vunpack.c.l.b16 %v142
    %v450 = vunpack.c.l.b16 %v143
    %v451 = vunpack.c.l.b16 %v144
    %v452 = vunpack.c.l.b16 %v145
    %v453 = vunpack.c.l.b16 %v146
    %v454 = vunpack.c.l.b16 %v147
    %v455 = vunpack.c.l.b16 %v148
    %v456 = vunpack.c.l.b16 %v149
    %v457 = vunpack.c.l.b16 %v150
    %v458 = vunpack.c.l.b16 %v151
    %v459 = vunpack.c.l.b16 %v152
    %v460 = vunpack.c.l.b16 %v153
    %v461 = vunpack.c.l.b16 %v154
    %v462 = vunpack.c.l.b16 %v155
    %v463 = vunpack.c.l.b16 %v156
    %v464 = vunpack.c.l.b16 %v157
    %v465 = vunpack.c.l.b16 %v158
    %v466 = vunpack.c.l.b16 %v159
    %v467 = vunpack.c.l.b16 %v160
    %v468 = vunpack.c.l.b16 %v161
    %v469 = vunpack.c.l.b16 %v162
    %v470 = vunpack.c.l.b16 %v163
    %v471 = vunpack.c.l.b16 %v164
    %v472 = vunpack.c.l.b16 %v165
    %v473 = vunpack.c.l.b16 %v166
    %v474 = vunpack.c.l.b16 %v167
    %v475 = vunpack.c.l.b16 %v168
    %v476 = vunpack.c.l.b16 %v169
    %v477 = vunpack.c.l.b16 %v170
    %v478 = vunpack.c.l.b16 %v171
    %v479 = vunpack.c.l.b16 %v172
    %v480 = vunpack.c.l.b16 %v173
    %v481 = vunpack.c.l.b16 %v174
    %v482 = vunpack.c.l.b16 %v175
    %v483 = vunpack.c.l.b16 %v176
    %v484 = vunpack.c.l.b16 %v177
    %v485 = vunpack.c.l.b16 %v178
    %v486 = vunpack.c.l.b16 %v179
    %v487 = vunpack.c.l.b16 %v180
    %v488 = vunpack.c.l.b16 %v181
    %v489 = vunpack.c.l.b16 %v182
    %v490 = vunpack.c.l.b16 %v183
    %v491 = vunpack.c.l.b16 %v184
    %v492 = vunpack.c.l.b16 %v185
    %v493 = vunpack.c.l.b16 %v186
    %v494 = vunpack.c.l.b16 %v187
    %v495 = vunpack.c.l.b16 %v188
    %v496 = vunpack.c.l.b16 %v189
    %v497 = vunpack.c.l.b16 %v190
    %v498 = vunpack.c.l.b16 %v191
    %v499 = vunpack.c.l.b16 %v192
    %v500 = vunpack.c.l.b16 %v193
    %v501 = vunpack.c.l.b16 %v194
    %v502 = vunpack.c.l.b16 %v195
    %v503 = vunpack.c.l.b16 %v196
    %v504 = vunpack.c.l.b16 %v197
    %v505 = vunpack.c.l.b16 %v198
    %v506 = vunpack.c.l.b16 %v199
    %v507 = vunpack.c.l.b16 %v200
    %v508 = vunpack.c.l.b16 %v201
    %v509 = vunpack.c.l.b16 %v202
    %v510 = vunpack.c.l.b16 %v203
    %v511 = vunpack.c.l.b16 %v204
    %v512 = vunpack.c.l.b16 %v205
    %v513 = vunpack.c.l.b16 %v206
    %v514 = vunpack.c.l.b16 %v207
    %v515 = vunpack.c.l.b16 %v208
    %v516 = vunpack.c.l.b16 %v209
    %v517 = vunpack.c.l.b16 %v210
    %v518 = vunpack.c.l.b16 %v211
    %v519 = vunpack.c.l.b16 %v212
    %v520 = vunpack.c.l.b16 %v213
    %v521 = vunpack.c.l.b16 %v214
    %v522 = vunpack.c.l.b16 %v215
    %v523 = vunpack.c.l.b16 %v216
    %v524 = vunpack.c.l.b16 %v217
    %v525 = vunpack.c.l.b16 %v218
    %v526 = vunpack.c.l.b16 %v219
    %v527 = vunpack.c.l.b16 %v220
    %v528 = vunpack.c.l.b16 %v221
    %v529 = vunpack.c.l.b16 %v222
    %v530 = vunpack.c.l.b16 %v223
    %v531 = vunpack.c.l.b16 %v224
    %v532 = vunpack.c.l.b16 %v225
    %v533 = vunpack.c.l.b16 %v226
    %v534 = vunpack.c.l.b16 %v227
    %v535 = vunpack.c.l.b16 %v228
    %v536 = vunpack.c.l.b16 %v229
    %v537 = vunpack.c.l.b16 %v230
    %v538 = vunpack.c.l.b16 %v231
    %v539 = vunpack.c.l.b16 %v232
    %v540 = vunpack.c.l.b16 %v233
    %v541 = vunpack.c.l.b16 %v234
    %v542 = vunpack.c.l.b16 %v235
    %v543 = vpack.c.b16 %v416, %v415
    %v544 = vpack.c.b16 %v418, %v417
    %v545 = vpack.c.b16 %v420, %v419
    %v546 = vpack.c.b16 %v422, %v421
    %v547 = vpack.c.b16 %v424, %v423
    %v548 = vpack.c.b16 %v426, %v425
    %v549 = vpack.c.b16 %v428, %v427
    %v550 = vpack.c.b16 %v430, %v429
    %v551 = vpack.c.b16 %v432, %v431
    %v552 = vpack.c.b16 %v434, %v433
    %v553 = vpack.c.b16 %v436, %v435
    %v554 = vpack.c.b16 %v438, %v437
    %v555 = vpack.c.b16 %v440, %v439
    %v556 = vpack.c.b16 %v442, %v441
    %v557 = vpack.c.b16 %v444, %v443
    %v558 = vpack.c.b16 %v446, %v445
    %v559 = vpack.c.b16 %v448, %v447
    %v560 = vpack.c.b16 %v450, %v449
    %v561 = vpack.c.b16 %v452, %v451
    %v562 = vpack.c.b16 %v454, %v453
    %v563 = vpack.c.b16 %v456, %v455
    %v564 = vpack.c.b16 %v458, %v457
    %v565 = vpack.c.b16 %v460, %v459
    %v566 = vpack.c.b16 %v462, %v461
    %v567 = vpack.c.b16 %v464, %v463
    %v568 = vpack.c.b16 %v466, %v465
    %v569 = vpack.c.b16 %v468, %v467
    %v570 = vpack.c.b16 %v470, %v469
    %v571 = vpack.c.b16 %v472, %v471
    %v572 = vpack.c.b16 %v474, %v473
    %v573 = vpack.c.b16 %v476, %v475
    %v574 = vpack.c.b16 %v478, %v477
    %v575 = vpack.c.b16 %v480, %v479
    %v576 = vpack.c.b16 %v482, %v481
    %v577 = vpack.c.b16 %v484, %v483
    %v578 = vpack.c.b16 %v486, %v485
    %v579 = vpack.c.b16 %v488, %v487
    %v580 = vpack.c.b16 %v490, %v489
    %v581 = vpack.c.b16 %v492, %v491
    %v582 = vpack.c.b16 %v494, %v493
    %v583 = vpack.c.b16 %v496, %v495
    %v584 = vpack.c.b16 %v498, %v497
    %v585 = vpack.c.b16 %v500, %v499
    %v586 = vpack.c.b16 %v502, %v501
    %v587 = vpack.c.b16 %v504, %v503
    %v588 = vpack.c.b16 %v506, %v505
    %v589 = vpack.c.b16 %v508, %v507
    %v590 = vpack.c.b16 %v510, %v509
    %v591 = vpack.c.b16 %v512, %v511
    %v592 = vpack.c.b16 %v514, %v513
    %v593 = vpack.c.b16 %v516, %v515
    %v594 = vpack.c.b16 %v518, %v517
    %v595 = vpack.c.b16 %v520, %v519
    %v596 = vpack.c.b16 %v522, %v521
    %v597 = vpack.c.b16 %v524, %v523
    %v598 = vpack.c.b16 %v526, %v525
    %v599 = vpack.c.b16 %v528, %v527
    %v600 = vpack.c.b16 %v530, %v529
    %v601 = vpack.c.b16 %v532, %v531
    %v602 = vpack.c.b16 %v534, %v533
    %v603 = vpack.c.b16 %v536, %v535
    %v604 = vpack.c.b16 %v538, %v537
    %v605 = vpack.c.b16 %v540, %v539
    %v606 = vpack.c.b16 %v542, %v541
    %671 = vmatprep.subr.bf16.mxu0 0
    %672 = vmatpush1.bf16.msra.mxu0 %v550
    %673 = vmatprep.subr.bf16.mxu0 0
    %674 = vmatpush1.bf16.msra.mxu0 %v549
    %675 = vmatprep.subr.bf16.mxu0 0
    %676 = vmatpush1.bf16.msra.mxu0 %v548
    %677 = vmatprep.subr.bf16.mxu0 0
    %678 = vmatpush1.bf16.msra.mxu0 %v547
    %679 = vmatprep.subr.bf16.mxu0 0
    %680 = vmatpush1.bf16.msra.mxu0 %v546
    %681 = vmatprep.subr.bf16.mxu0 0
    %682 = vmatpush1.bf16.msra.mxu0 %v545
    %683 = vmatprep.subr.bf16.mxu0 0
    %684 = vmatpush1.bf16.msra.mxu0 %v544
    %685 = vmatprep.subr.bf16.mxu0 0
    %686 = vmatpush1.bf16.msra.mxu0 %v543
    %687 = vmatprep.subr.bf16.mxu0 0
    %688 = vmatpush2.bf16.msra.mxu0 %v558
    %689 = vmatprep.subr.bf16.mxu0 0
    %690 = vmatpush2.bf16.msra.mxu0 %v557
    %691 = vmatprep.subr.bf16.mxu0 0
    %692 = vmatpush2.bf16.msra.mxu0 %v556
    %693 = vmatprep.subr.bf16.mxu0 0
    %694 = vmatpush2.bf16.msra.mxu0 %v555
    %695 = vmatprep.subr.bf16.mxu0 0
    %696 = vmatpush2.bf16.msra.mxu0 %v554
    %697 = vmatprep.subr.bf16.mxu0 0
    %698 = vmatpush2.bf16.msra.mxu0 %v553
    %699 = vmatprep.subr.bf16.mxu0 0
    %700 = vmatpush2.bf16.msra.mxu0 %v552
    %701 = vmatprep.subr.bf16.mxu0 0
    %702 = vmatpush2.bf16.msra.mxu0 %v551
    %703 = vmatprep.mubr.bf16.mxu0 %v101
    %704 = vmatmul.mubr.bf16.gmra.mxu0 %v100
    %v705 = vpop.f32.mrf.mxu0
    %v706 = vadd.f32 %v282, %v705
    %v707 = vpop.f32.mrf.mxu0
    %v708 = vpop.f32.mrf.mxu0
    %v709 = vpop.f32.mrf.mxu0
    %710 = vdwg.mxu0
    %711 = vmatprep.subr.bf16.mxu0 0
    %712 = vmatpush1.bf16.msra.mxu0 %v566
    %713 = vmatprep.subr.bf16.mxu0 0
    %714 = vmatpush1.bf16.msra.mxu0 %v565
    %715 = vmatprep.subr.bf16.mxu0 0
    %716 = vmatpush1.bf16.msra.mxu0 %v564
    %717 = vmatprep.subr.bf16.mxu0 0
    %718 = vmatpush1.bf16.msra.mxu0 %v563
    %719 = vmatprep.subr.bf16.mxu0 0
    %720 = vmatpush1.bf16.msra.mxu0 %v562
    %721 = vmatprep.subr.bf16.mxu0 0
    %722 = vmatpush1.bf16.msra.mxu0 %v561
    %723 = vmatprep.subr.bf16.mxu0 0
    %724 = vmatpush1.bf16.msra.mxu0 %v560
    %725 = vmatprep.subr.bf16.mxu0 0
    %726 = vmatpush1.bf16.msra.mxu0 %v559
    %727 = vmatprep.subr.bf16.mxu0 0
    %728 = vmatpush2.bf16.msra.mxu0 %v574
    %729 = vmatprep.subr.bf16.mxu0 0
    %730 = vmatpush2.bf16.msra.mxu0 %v573
    %731 = vmatprep.subr.bf16.mxu0 0
    %732 = vmatpush2.bf16.msra.mxu0 %v572
    %733 = vmatprep.subr.bf16.mxu0 0
    %734 = vmatpush2.bf16.msra.mxu0 %v571
    %735 = vmatprep.subr.bf16.mxu0 0
    %736 = vmatpush2.bf16.msra.mxu0 %v570
    %737 = vmatprep.subr.bf16.mxu0 0
    %738 = vmatpush2.bf16.msra.mxu0 %v569
    %739 = vmatprep.subr.bf16.mxu0 0
    %740 = vmatpush2.bf16.msra.mxu0 %v568
    %741 = vmatprep.subr.bf16.mxu0 0
    %742 = vmatpush2.bf16.msra.mxu0 %v567
    %743 = vmatprep.mubr.bf16.mxu0 %v103
    %744 = vmatmul.mubr.bf16.gmra.mxu0 %v102
    %v745 = vpop.f32.mrf.mxu0
    %v746 = vadd.f32 %v706, %v745
    %v747 = vpop.f32.mrf.mxu0
    %v748 = vpop.f32.mrf.mxu0
    %v749 = vpop.f32.mrf.mxu0
    %750 = vdwg.mxu0
    %751 = vmatprep.subr.bf16.mxu0 0
    %752 = vmatpush1.bf16.msra.mxu0 %v582
    %753 = vmatprep.subr.bf16.mxu0 0
    %754 = vmatpush1.bf16.msra.mxu0 %v581
    %755 = vmatprep.subr.bf16.mxu0 0
    %756 = vmatpush1.bf16.msra.mxu0 %v580
    %757 = vmatprep.subr.bf16.mxu0 0
    %758 = vmatpush1.bf16.msra.mxu0 %v579
    %759 = vmatprep.subr.bf16.mxu0 0
    %760 = vmatpush1.bf16.msra.mxu0 %v578
    %761 = vmatprep.subr.bf16.mxu0 0
    %762 = vmatpush1.bf16.msra.mxu0 %v577
    %763 = vmatprep.subr.bf16.mxu0 0
    %764 = vmatpush1.bf16.msra.mxu0 %v576
    %765 = vmatprep.subr.bf16.mxu0 0
    %766 = vmatpush1.bf16.msra.mxu0 %v575
    %767 = vmatprep.subr.bf16.mxu0 0
    %768 = vmatpush2.bf16.msra.mxu0 %v590
    %769 = vmatprep.subr.bf16.mxu0 0
    %770 = vmatpush2.bf16.msra.mxu0 %v589
    %771 = vmatprep.subr.bf16.mxu0 0
    %772 = vmatpush2.bf16.msra.mxu0 %v588
    %773 = vmatprep.subr.bf16.mxu0 0
    %774 = vmatpush2.bf16.msra.mxu0 %v587
    %775 = vmatprep.subr.bf16.mxu0 0
    %776 = vmatpush2.bf16.msra.mxu0 %v586
    %777 = vmatprep.subr.bf16.mxu0 0
    %778 = vmatpush2.bf16.msra.mxu0 %v585
    %779 = vmatprep.subr.bf16.mxu0 0
    %780 = vmatpush2.bf16.msra.mxu0 %v584
    %781 = vmatprep.subr.bf16.mxu0 0
    %782 = vmatpush2.bf16.msra.mxu0 %v583
    %783 = vmatprep.mubr.bf16.mxu0 %v105
    %784 = vmatmul.mubr.bf16.gmra.mxu0 %v104
    %v785 = vpop.f32.mrf.mxu0
    %v786 = vadd.f32 %v746, %v785
    %v787 = vpop.f32.mrf.mxu0
    %v788 = vpop.f32.mrf.mxu0
    %v789 = vpop.f32.mrf.mxu0
    %790 = vdwg.mxu0
    %791 = vmatprep.subr.bf16.mxu0 0
    %792 = vmatpush1.bf16.msra.mxu0 %v598
    %793 = vmatprep.subr.bf16.mxu0 0
    %794 = vmatpush1.bf16.msra.mxu0 %v597
    %795 = vmatprep.subr.bf16.mxu0 0
    %796 = vmatpush1.bf16.msra.mxu0 %v596
    %797 = vmatprep.subr.bf16.mxu0 0
    %798 = vmatpush1.bf16.msra.mxu0 %v595
    %799 = vmatprep.subr.bf16.mxu0 0
    %800 = vmatpush1.bf16.msra.mxu0 %v594
    %801 = vmatprep.subr.bf16.mxu0 0
    %802 = vmatpush1.bf16.msra.mxu0 %v593
    %803 = vmatprep.subr.bf16.mxu0 0
    %804 = vmatpush1.bf16.msra.mxu0 %v592
    %805 = vmatprep.subr.bf16.mxu0 0
    %806 = vmatpush1.bf16.msra.mxu0 %v591
    %807 = vmatprep.subr.bf16.mxu0 0
    %808 = vmatpush2.bf16.msra.mxu0 %v606
    %809 = vmatprep.subr.bf16.mxu0 0
    %810 = vmatpush2.bf16.msra.mxu0 %v605
    %811 = vmatprep.subr.bf16.mxu0 0
    %812 = vmatpush2.bf16.msra.mxu0 %v604
    %813 = vmatprep.subr.bf16.mxu0 0
    %814 = vmatpush2.bf16.msra.mxu0 %v603
    %815 = vmatprep.subr.bf16.mxu0 0
    %816 = vmatpush2.bf16.msra.mxu0 %v602
    %817 = vmatprep.subr.bf16.mxu0 0
    %818 = vmatpush2.bf16.msra.mxu0 %v601
    %819 = vmatprep.subr.bf16.mxu0 0
    %820 = vmatpush2.bf16.msra.mxu0 %v600
    %821 = vmatprep.subr.bf16.mxu0 0
    %822 = vmatpush2.bf16.msra.mxu0 %v599
    %823 = vmatprep.mubr.bf16.mxu0 %v107
    %824 = vmatmul.mubr.bf16.gmra.mxu0 %v106
    %v825 = vpop.f32.mrf.mxu0
    %v826 = vadd.f32 %v786, %v825
    %v827 = vpop.f32.mrf.mxu0
    %v828 = vpop.f32.mrf.mxu0
    %v829 = vpop.f32.mrf.mxu0
    %830 = vdwg.mxu0
    %v831 = vld [vmem:[%s1] sm:$0x3]
    %v832 = vld [vmem:[%s4] sm:$0x1]
    %834 = vset.pattern.permute.xlu0 0
    %835 = vperm.xlu0 %834, %v831
    %v836 = vpop.permute.xlu0 %835
    %v839 = vlaneseq
    %v840 = vshrl.u32 %v839, 7
    %v841 = vsub.s32 0, %v840
    %v842 = vrot.slane %v832, %v841
    %v844 = vmul.f32 %v836, %v842
    %v845 = vadd.f32 %v826, %v844
    %v846 = vld [vmem:[%s6] sm:$0x1]
    %v848 = vlaneseq
    %v849 = vshrl.u32 %v848, 7
    %v850 = vsub.s32 0, %v849
    %v851 = vrot.slane %v846, %v850
    %v853 = vadd.f32 %v845, %v851
    %v854 = vmul.f32 %v853, %v853
    %v855 = vmul.f32 %v853, %v854
    %v856 = vmul.f32 %v855, 0.044715
    %v857 = vadd.f32 %v853, %v856
    %v858 = vmul.f32 %v857, 0.7978846
    %v859 = vtanh.pop %v858
    %v860 = vadd.f32 %v859, 1.0
    %v861 = vmul.f32 %v860, 0.5
    %v862 = vmul.f32 %v853, %v861
    %863 = vst [vmem:[#allocation7] sm:$0x3] %v862
    // Predicated region
    $region38: #{_fused_encode.1} parent=1 // pred_check
      _
    $region39: #{_fused_encode.1} parent=1 // pred_check_branch
      %865 = sbr.rel (0) target = $region41
    $region40: #{_fused_encode.1} parent=1 // pred_region
      %s867 = ssub.s32 32, 32
      %868 = vsyncadd [#allocation4], %s867
      %s870 = sshll.u32 [#allocation7], 4
      %s871 = int_to_ptr.vmem [resolvable:$true] %s870
      %873 = dma.vmem_to_hbm [thread:$0]  %s871, 32, %s7, [#allocation4]
    $region41: #{_fused_encode.1} parent=1 // pred_fallthru
      _
    // Predicated region
    $region42: #{_fused_encode.1} parent=1 // pred_check
      _
    $region43: #{_fused_encode.1} parent=1 // pred_check_branch
      %875 = sbr.rel (0) target = $region45
    $region44: #{_fused_encode.1} parent=1 // pred_region
      %876 = dma.done [#allocation4], 32
    $region45: #{_fused_encode.1} parent=1 // pred_fallthru
      _
    %877 = vsyncpa [#allocation3], 1
    %878 = vsyncpa [#allocation6], 1
    %879 = vsyncpa [#allocation4], 1

</llo_original>
